<compile_context>
chip_gen: v7x
topology: tpu7x:2x2x1
jax: 0.10.0
libtpu: 0.0.40
codegen_flags: <defaults>
</compile_context>

<pallas_src>
import jax
import jax.numpy as jnp
from jax.experimental import pallas as pl
from jax.experimental.pallas import tpu as pltpu


def wine_mlp_kernel(x_ref, w1_ref, b1_ref, w2_ref, b2_ref, w3_ref, b3_ref, o_ref):
    # x_ref: (TB, F_in) f32 -> cast to bf16 in-kernel (no extra HBM pass in the
    # wrapper). w1/w2/w3 are bf16; biases f32; all accumulation f32 on the MXU.
    x_bf = x_ref[...].astype(jnp.bfloat16)
    h1 = jnp.dot(x_bf, w1_ref[...], preferred_element_type=jnp.float32)
    h1 = jnp.maximum(h1 + b1_ref[...], 0.0)                      # relu(fc1), f32
    h2 = jnp.dot(h1.astype(jnp.bfloat16), w2_ref[...],
                 preferred_element_type=jnp.float32)
    h2 = jnp.maximum(h2 + b2_ref[...], 0.0)                      # relu(fc2), f32
    o_ref[...] = (                                               # fc3 logits (class dim padded to 8)
        jnp.dot(h2.astype(jnp.bfloat16), w3_ref[...],
                preferred_element_type=jnp.float32)
        + b3_ref[...]
    )


def _round_up(n, m):
    return ((n + m - 1) // m) * m


def prepare_params(params):
    """One-time parameter preprocessing (hoisted out of the per-call path).

    params = (w1, b1, w2, b2, w3, b3) with weights stored (in, out).
    Returns (w1_bf16, b1_f32(1,h1), w2_bf16, b2_f32(1,h2), w3_padded_bf16,
             b3_padded_f32, num_classes).
    """
    w1, b1, w2, b2, w3, b3 = params
    hidden2, num_classes = w3.shape
    n_pad = _round_up(max(num_classes, 8), 8)     # lane padding to 8, not 128

    w3p = (jnp.zeros((hidden2, n_pad), jnp.bfloat16)
           .at[:, :num_classes].set(w3.astype(jnp.bfloat16)))
    b3p = (jnp.zeros((1, n_pad), jnp.float32)
           .at[:, :num_classes].set(jnp.reshape(b3, (1, -1)).astype(jnp.float32)))

    return (
        w1.astype(jnp.bfloat16),
        jnp.reshape(b1, (1, -1)).astype(jnp.float32),
        w2.astype(jnp.bfloat16),
        jnp.reshape(b2, (1, -1)).astype(jnp.float32),
        w3p,
        b3p,
        int(num_classes),
    )


def wine_quality_net(x, prepared, *, tb_max=2048, core_parallel=False):
    """Forward pass of WineQualityNet. x: (batch, in_features) f32.
    `prepared` comes from prepare_params()."""
    w1, b1, w2, b2, w3p, b3p, num_classes = prepared
    batch, in_features = x.shape
    hidden1 = w1.shape[1]
    hidden2 = w2.shape[1]
    n_pad = w3p.shape[1]

    # Balanced batch tiles (multiple of 8 sublanes), no wrapper-side batch pad.
    n_tiles = max(1, pl.cdiv(batch, tb_max))
    tb = min(_round_up(pl.cdiv(batch, n_tiles), 8), _round_up(batch, 8))
    grid = (pl.cdiv(batch, tb),)   # ragged last block: Pallas masks OOB writeback

    # PARALLEL is safe everywhere; CORE_PARALLEL splits the batch grid across
    # v7x's two TensorCores (enable there when grid >= 2).
    dim_sem = (pltpu.CORE_PARALLEL,) if core_parallel else (pltpu.PARALLEL,)

    out = pl.pallas_call(
        wine_mlp_kernel,
        out_shape=jax.ShapeDtypeStruct((batch, n_pad), jnp.float32),
        grid_spec=pltpu.PrefetchScalarGridSpec(
            num_scalar_prefetch=0,
            grid=grid,
            in_specs=[
                pl.BlockSpec((tb, in_features), lambda i: (i, 0)),       # x: tiled over batch
                pl.BlockSpec((in_features, hidden1), lambda i: (0, 0)),  # w1 (bf16) resident
                pl.BlockSpec((1, hidden1), lambda i: (0, 0)),            # b1 resident
                pl.BlockSpec((hidden1, hidden2), lambda i: (0, 0)),      # w2 (bf16) resident
                pl.BlockSpec((1, hidden2), lambda i: (0, 0)),            # b2 resident
                pl.BlockSpec((hidden2, n_pad), lambda i: (0, 0)),        # w3 (padded, bf16) resident
                pl.BlockSpec((1, n_pad), lambda i: (0, 0)),              # b3 (padded) resident
            ],
            out_specs=pl.BlockSpec((tb, n_pad), lambda i: (i, 0)),       # full-row contiguous writeback
        ),
        compiler_params=pltpu.CompilerParams(
            dimension_semantics=dim_sem,
            vmem_limit_bytes=32 * 1024 * 1024,   # headroom; fits all generations
        ),
    )(x, w1, b1, w2, b2, w3p, b3p)

    return out[:, :num_classes]


def init_linear(key, fan_in, fan_out):
    # Mirror PyTorch nn.Linear default init: U(-1/sqrt(fan_in), 1/sqrt(fan_in)).
    # Stored transposed vs. PyTorch ((in, out) instead of (out, in)) so the kernel does x @ W.
    kw, kb = jax.random.split(key)
    bound = 1.0 / jnp.sqrt(float(fan_in))
    w = jax.random.uniform(kw, (fan_in, fan_out), jnp.float32, -bound, bound)
    b = jax.random.uniform(kb, (1, fan_out), jnp.float32, -bound, bound)
    return w, b


if __name__ == "__main__":
    # Wine-quality shapes: 11 input features, 6 quality classes.
    batch, in_features, num_classes = 8, 11, 6

    key = jax.random.PRNGKey(0)
    kx, k1, k2, k3 = jax.random.split(key, 4)

    x = jax.random.normal(kx, (batch, in_features), jnp.float32)
    w1, b1 = init_linear(k1, in_features, 128)
    w2, b2 = init_linear(k2, 128, 64)
    w3, b3 = init_linear(k3, 64, num_classes)
    params = (w1, b1, w2, b2, w3, b3)

    prepared = prepare_params(params)           # one-time: bf16 casts + class-dim padding
    out = wine_quality_net(x, prepared)
    out = jax.block_until_ready(out)
    assert out.shape == (batch, num_classes)

    # Reference 1: same mixed precision as the kernel (bf16 MXU operands, f32 accumulate/bias/ReLU).
    h1 = jnp.maximum(
        jnp.dot(x.astype(jnp.bfloat16), w1.astype(jnp.bfloat16),
                preferred_element_type=jnp.float32) + b1, 0.0)
    h2 = jnp.maximum(
        jnp.dot(h1.astype(jnp.bfloat16), w2.astype(jnp.bfloat16),
                preferred_element_type=jnp.float32) + b2, 0.0)
    ref_mp = jnp.dot(h2.astype(jnp.bfloat16), w3.astype(jnp.bfloat16),
                     preferred_element_type=jnp.float32) + b3
    assert jnp.allclose(out, ref_mp, atol=2e-3, rtol=2e-3)

    # Reference 2: full-f32 forward pass (loose tolerance — bf16 MXU operands are an
    # intentional, documented precision trade-off for this ReLU MLP).
    ref_f32 = jnp.maximum(x @ w1 + b1, 0.0)
    ref_f32 = jnp.maximum(ref_f32 @ w2 + b2, 0.0)
    ref_f32 = ref_f32 @ w3 + b3
    assert jnp.allclose(out, ref_f32, atol=0.15, rtol=0.15)

    print("KERNEL_OK")
</pallas_src>

<mosaic_0001>
module attributes {stable_mosaic.version = 11 : i64} {
  func.func @wine_mlp_kernel(%arg0: i32, %arg1: memref<8x11xf32, #tpu.memory_space<vmem>>, %arg2: memref<11x128xbf16, #tpu.memory_space<vmem>>, %arg3: memref<1x128xf32, #tpu.memory_space<vmem>>, %arg4: memref<128x64xbf16, #tpu.memory_space<vmem>>, %arg5: memref<1x64xf32, #tpu.memory_space<vmem>>, %arg6: memref<64x8xbf16, #tpu.memory_space<vmem>>, %arg7: memref<1x8xf32, #tpu.memory_space<vmem>>, %arg8: memref<8x8xf32, #tpu.memory_space<vmem>>) attributes {dimension_semantics = [#tpu.dimension_semantics<parallel>], iteration_bounds = array<i64: 1>, scalar_prefetch = 0 : i64, scratch_operands = 0 : i64, tpu.core_type = #tpu.core_type<tc>, window_params = [{transform_indices = @transform_0, window_bounds = array<i64: 8, 11>}, {pipeline_mode = #tpu.pipeline_mode<synchronous>, transform_indices = @transform_1, window_bounds = array<i64: 11, 128>}, {pipeline_mode = #tpu.pipeline_mode<synchronous>, transform_indices = @transform_2, window_bounds = array<i64: 1, 128>}, {pipeline_mode = #tpu.pipeline_mode<synchronous>, transform_indices = @transform_3, window_bounds = array<i64: 128, 64>}, {pipeline_mode = #tpu.pipeline_mode<synchronous>, transform_indices = @transform_4, window_bounds = array<i64: 1, 64>}, {pipeline_mode = #tpu.pipeline_mode<synchronous>, transform_indices = @transform_5, window_bounds = array<i64: 64, 8>}, {pipeline_mode = #tpu.pipeline_mode<synchronous>, transform_indices = @transform_6, window_bounds = array<i64: 1, 8>}, {transform_indices = @transform_7, window_bounds = array<i64: 8, 8>}]} {
    %c0 = arith.constant 0 : index
    %c0_0 = arith.constant 0 : index
    %0 = vector.load %arg1[%c0, %c0_0] : memref<8x11xf32, #tpu.memory_space<vmem>>, vector<8x11xf32>
    %1 = arith.truncf %0 : vector<8x11xf32> to vector<8x11xbf16>
    %c0_1 = arith.constant 0 : index
    %c0_2 = arith.constant 0 : index
    %2 = vector.load %arg2[%c0_1, %c0_2] : memref<11x128xbf16, #tpu.memory_space<vmem>>, vector<11x128xbf16>
    %cst = arith.constant dense<0.000000e+00> : vector<8x128xf32>
    %3 = tpu.matmul %1, %2, %cst {dimension_numbers = #tpu.dot_dimension_numbers<[1], [0], [0], [1], [0, 0, 1, 1], [], []>} : vector<8x11xbf16>, vector<11x128xbf16>, vector<8x128xf32> -> vector<8x128xf32>
    %c0_3 = arith.constant 0 : index
    %c0_4 = arith.constant 0 : index
    %4 = vector.load %arg3[%c0_3, %c0_4] : memref<1x128xf32, #tpu.memory_space<vmem>>, vector<1x128xf32>
    %5 = vector.broadcast %4 : vector<1x128xf32> to vector<8x128xf32>
    %6 = arith.addf %3, %5 : vector<8x128xf32>
    %cst_5 = arith.constant 0.000000e+00 : f32
    %7 = vector.broadcast %cst_5 : f32 to vector<8x128xf32>
    %8 = arith.maximumf %6, %7 : vector<8x128xf32>
    %9 = arith.truncf %8 : vector<8x128xf32> to vector<8x128xbf16>
    %c0_6 = arith.constant 0 : index
    %c0_7 = arith.constant 0 : index
    %10 = vector.load %arg4[%c0_6, %c0_7] : memref<128x64xbf16, #tpu.memory_space<vmem>>, vector<128x64xbf16>
    %cst_8 = arith.constant dense<0.000000e+00> : vector<8x64xf32>
    %11 = tpu.matmul %9, %10, %cst_8 {dimension_numbers = #tpu.dot_dimension_numbers<[1], [0], [0], [1], [0, 0, 1, 1], [], []>} : vector<8x128xbf16>, vector<128x64xbf16>, vector<8x64xf32> -> vector<8x64xf32>
    %c0_9 = arith.constant 0 : index
    %c0_10 = arith.constant 0 : index
    %12 = vector.load %arg5[%c0_9, %c0_10] : memref<1x64xf32, #tpu.memory_space<vmem>>, vector<1x64xf32>
    %13 = vector.broadcast %12 : vector<1x64xf32> to vector<8x64xf32>
    %14 = arith.addf %11, %13 : vector<8x64xf32>
    %cst_11 = arith.constant 0.000000e+00 : f32
    %15 = vector.broadcast %cst_11 : f32 to vector<8x64xf32>
    %16 = arith.maximumf %14, %15 : vector<8x64xf32>
    %17 = arith.truncf %16 : vector<8x64xf32> to vector<8x64xbf16>
    %c0_12 = arith.constant 0 : index
    %c0_13 = arith.constant 0 : index
    %18 = vector.load %arg6[%c0_12, %c0_13] : memref<64x8xbf16, #tpu.memory_space<vmem>>, vector<64x8xbf16>
    %cst_14 = arith.constant dense<0.000000e+00> : vector<8x8xf32>
    %19 = tpu.matmul %17, %18, %cst_14 {dimension_numbers = #tpu.dot_dimension_numbers<[1], [0], [0], [1], [0, 0, 1, 1], [], []>} : vector<8x64xbf16>, vector<64x8xbf16>, vector<8x8xf32> -> vector<8x8xf32>
    %c0_15 = arith.constant 0 : index
    %c0_16 = arith.constant 0 : index
    %20 = vector.load %arg7[%c0_15, %c0_16] : memref<1x8xf32, #tpu.memory_space<vmem>>, vector<1x8xf32>
    %21 = vector.broadcast %20 : vector<1x8xf32> to vector<8x8xf32>
    %22 = arith.addf %19, %21 : vector<8x8xf32>
    %c0_17 = arith.constant 0 : index
    %c0_18 = arith.constant 0 : index
    %23 = vector.load %arg8[%c0_17, %c0_18] : memref<8x8xf32, #tpu.memory_space<vmem>>, vector<8x8xf32>
    tpu.vector_store %arg8[%c0_17, %c0_18], %22 {strides = array<i32>} : memref<8x8xf32, #tpu.memory_space<vmem>>, vector<8x8xf32>,
    return
  }
  func.func @transform_0(%arg0: i32) -> (i32, i32) {
    %c0_i32 = arith.constant 0 : i32
    %c0_i32_0 = arith.constant 0 : i32
    return %arg0, %c0_i32 : i32, i32
  }
  func.func @transform_1(%arg0: i32) -> (i32, i32) {
    %c0_i32 = arith.constant 0 : i32
    %c0_i32_0 = arith.constant 0 : i32
    %c0_i32_1 = arith.constant 0 : i32
    return %c0_i32, %c0_i32_0 : i32, i32
  }
  func.func @transform_2(%arg0: i32) -> (i32, i32) {
    %c0_i32 = arith.constant 0 : i32
    %c0_i32_0 = arith.constant 0 : i32
    %c0_i32_1 = arith.constant 0 : i32
    return %c0_i32, %c0_i32_0 : i32, i32
  }
  func.func @transform_3(%arg0: i32) -> (i32, i32) {
    %c0_i32 = arith.constant 0 : i32
    %c0_i32_0 = arith.constant 0 : i32
    %c0_i32_1 = arith.constant 0 : i32
    return %c0_i32, %c0_i32_0 : i32, i32
  }
  func.func @transform_4(%arg0: i32) -> (i32, i32) {
    %c0_i32 = arith.constant 0 : i32
    %c0_i32_0 = arith.constant 0 : i32
    %c0_i32_1 = arith.constant 0 : i32
    return %c0_i32, %c0_i32_0 : i32, i32
  }
  func.func @transform_5(%arg0: i32) -> (i32, i32) {
    %c0_i32 = arith.constant 0 : i32
    %c0_i32_0 = arith.constant 0 : i32
    %c0_i32_1 = arith.constant 0 : i32
    return %c0_i32, %c0_i32_0 : i32, i32
  }
  func.func @transform_6(%arg0: i32) -> (i32, i32) {
    %c0_i32 = arith.constant 0 : i32
    %c0_i32_0 = arith.constant 0 : i32
    %c0_i32_1 = arith.constant 0 : i32
    return %c0_i32, %c0_i32_0 : i32, i32
  }
  func.func @transform_7(%arg0: i32) -> (i32, i32) {
    %c0_i32 = arith.constant 0 : i32
    %c0_i32_0 = arith.constant 0 : i32
    return %arg0, %c0_i32 : i32, i32
  }
}

</mosaic_0001>

<llo_original>
// kernel: tpu_custom_call.1
$region0: #{tpu_custom_call.1}
  #allocation0 [shape = 'u32[]', space=smem, size = 0x4, offset = 0x4, fixed_abs, tag = 'smem constant byte address 0x4 - core index']
  #allocation1 [shape = 'u32[144,128]{1,0:T(1,128)}', space=vmem, size = 0x12000, scoped, tag = 'internal scratch']
  %s0 = inlined_call_operand.vmem [shape: f32[8,11], index: 0, kind: input, shape index: {}]
  %s1 = inlined_call_operand.vmem [shape: bf16[11,128], index: 1, kind: input, shape index: {}]
  %s2 = inlined_call_operand.vmem [shape: f32[1,128], index: 2, kind: input, shape index: {}]
  %s3 = inlined_call_operand.vmem [shape: bf16[128,64], index: 3, kind: input, shape index: {}]
  %s4 = inlined_call_operand.vmem [shape: f32[1,64], index: 4, kind: input, shape index: {}]
  %s5 = inlined_call_operand.vmem [shape: bf16[64,8], index: 5, kind: input, shape index: {}]
  %s6 = inlined_call_operand.vmem [shape: f32[1,8], index: 6, kind: input, shape index: {}]
  %s7 = inlined_call_operand.hbm [shape: f32[8,8], index: 7, kind: output, shape index: {}]
  %s8 = sld [smem:[#allocation0]]
  $region38: #{tpu_custom_call.1} parent=0
    _
  %s10 = ssub.s32 1, %s8
  %s11 = scalar_select 0, %s10, %s8
  $region1: #{tpu_custom_call.1} parent=0
    #allocation2 [shape = 'u8[4096]{0}', space=vmem, size = 0x1000, scoped, tag = 'output window, operand 0, single buffered']
    #allocation3 [shape = 's32[1]{0}', space=sflag, size = 0x4, scoped, tag = 'scoped memory for tpu_custom_call.1']
    %12 = vsyncpa [#allocation3], 0
    // Predicated region
    $region2: #{tpu_custom_call.1} parent=1 // pred_check
      _
    $region3: #{tpu_custom_call.1} parent=1 // pred_check_branch
      %14 = sbr.rel (0) target = $region5
    $region4: #{tpu_custom_call.1} parent=1 // pred_region
      _
    $region5: #{tpu_custom_call.1} parent=1 // pred_fallthru
      _
    // Predicated region
    $region6: #{tpu_custom_call.1} parent=1 // pred_check
      _
    $region7: #{tpu_custom_call.1} parent=1 // pred_check_branch
      %16 = sbr.rel (0) target = $region9
    $region8: #{tpu_custom_call.1} parent=1 // pred_region
      _
    $region9: #{tpu_custom_call.1} parent=1 // pred_fallthru
      _
    // Predicated region
    $region10: #{tpu_custom_call.1} parent=1 // pred_check
      _
    $region11: #{tpu_custom_call.1} parent=1 // pred_check_branch
      %18 = sbr.rel (0) target = $region13
    $region12: #{tpu_custom_call.1} parent=1 // pred_region
      _
    $region13: #{tpu_custom_call.1} parent=1 // pred_fallthru
      _
    // Predicated region
    $region14: #{tpu_custom_call.1} parent=1 // pred_check
      _
    $region15: #{tpu_custom_call.1} parent=1 // pred_check_branch
      %20 = sbr.rel (0) target = $region17
    $region16: #{tpu_custom_call.1} parent=1 // pred_region
      _
    $region17: #{tpu_custom_call.1} parent=1 // pred_fallthru
      _
    // Predicated region
    $region18: #{tpu_custom_call.1} parent=1 // pred_check
      _
    $region19: #{tpu_custom_call.1} parent=1 // pred_check_branch
      %22 = sbr.rel (0) target = $region21
    $region20: #{tpu_custom_call.1} parent=1 // pred_region
      _
    $region21: #{tpu_custom_call.1} parent=1 // pred_fallthru
      _
    // Predicated region
    $region22: #{tpu_custom_call.1} parent=1 // pred_check
      _
    $region23: #{tpu_custom_call.1} parent=1 // pred_check_branch
      %24 = sbr.rel (0) target = $region25
    $region24: #{tpu_custom_call.1} parent=1 // pred_region
      _
    $region25: #{tpu_custom_call.1} parent=1 // pred_fallthru
      _
    // Predicated region
    $region26: #{tpu_custom_call.1} parent=1 // pred_check
      _
    $region27: #{tpu_custom_call.1} parent=1 // pred_check_branch
      %26 = sbr.rel (0) target = $region29
    $region28: #{tpu_custom_call.1} parent=1 // pred_region
      _
    $region29: #{tpu_custom_call.1} parent=1 // pred_fallthru
      _
    %v28 = vld [vmem:[%s0] sm:$0xff]
    %v29 = vpack.c.bf16 %v28, %v28
    %v30 = vld [vmem:[%s1] sm:$0xf]
    %v31 = vld [vmem:[%s1 + $0x4] sm:$0x3]
    %v32 = vld [vmem:[%s2] sm:$0x1]
    %v34 = vlaneseq
    %v35 = vshrl.u32 %v34, 7
    %v36 = vsub.s32 0, %v35
    %v37 = vrot.slane %v32, %v36
    %v41 = vunpack.c.l.b16 %v30
    %v42 = vunpack.c.l.b16 %v31
    %v43 = vpack.c.b16 %v42, %v41
    %vm44 = vcmask 89088
    %v46 = vsel %vm44, %v29, 0
    %vm48 = vcmask 1044480
    %vm49 = vcmask 1045504
    %v50 = vsel %vm48, 4294967295, 65535
    %v51 = vsel %vm49, %v50, 0
    %v53 = vand.u32 %v43, %v51
    %55 = vmatprep.subr.bf16.mxu0 0
    %56 = vmatpush1.bf16.msra.mxu0 %v53
    %57 = vmatprep.subr.bf16.mxu0 0
    %58 = vmatpush1.bf16.msra.mxu0 0
    %59 = vmatprep.subr.bf16.mxu0 0
    %60 = vmatpush1.bf16.msra.mxu0 0
    %61 = vmatprep.subr.bf16.mxu0 0
    %62 = vmatpush1.bf16.msra.mxu0 0
    %63 = vmatprep.subr.bf16.mxu0 0
    %64 = vmatpush1.bf16.msra.mxu0 0
    %65 = vmatprep.subr.bf16.mxu0 0
    %66 = vmatpush1.bf16.msra.mxu0 0
    %67 = vmatprep.subr.bf16.mxu0 0
    %68 = vmatpush1.bf16.msra.mxu0 0
    %69 = vmatprep.subr.bf16.mxu0 0
    %70 = vmatpush1.bf16.msra.mxu0 0
    %71 = vmatprep.subr.bf16.mxu0 0
    %72 = vmatpush1.bf16.msra.mxu0 0
    %73 = vmatprep.subr.bf16.mxu0 0
    %74 = vmatpush1.bf16.msra.mxu0 0
    %75 = vmatprep.subr.bf16.mxu0 0
    %76 = vmatpush1.bf16.msra.mxu0 0
    %77 = vmatprep.subr.bf16.mxu0 0
    %78 = vmatpush1.bf16.msra.mxu0 0
    %79 = vmatprep.subr.bf16.mxu0 0
    %80 = vmatpush1.bf16.msra.mxu0 0
    %81 = vmatprep.subr.bf16.mxu0 0
    %82 = vmatpush1.bf16.msra.mxu0 0
    %83 = vmatprep.subr.bf16.mxu0 0
    %84 = vmatpush1.bf16.msra.mxu0 0
    %85 = vmatprep.subr.bf16.mxu0 0
    %86 = vmatpush1.bf16.msra.mxu0 0
    %87 = vmatprep.mubr.bf16.mxu0 0
    %88 = vmatmul.mubr.bf16.gmra.mrb[0].mxu0 %v46
    %v89 = vpop.f32.mrb[0].mxu0
    %v90 = vadd.f32 %v37, %v89
    %v91 = vpop.f32.mrb[0].mxu0
    %v92 = vpop.f32.mrb[0].mxu0
    %v93 = vpop.f32.mrb[0].mxu0
    %94 = vdwg.mxu0
    %v95 = vmax.f32 %v90, 0.0
    %v96 = vpack.c.bf16 %v95, %v95
    %v97 = vld [vmem:[%s3] sm:$0xf]
    %v98 = vld [vmem:[%s3 + $0x4] sm:$0xf]
    %v99 = vld [vmem:[%s3 + $0x8] sm:$0xf]
    %v100 = vld [vmem:[%s3 + $0xc] sm:$0xf]
    %v101 = vld [vmem:[%s3 + $0x10] sm:$0xf]
    %v102 = vld [vmem:[%s3 + $0x14] sm:$0xf]
    %v103 = vld [vmem:[%s3 + $0x18] sm:$0xf]
    %v104 = vld [vmem:[%s3 + $0x1c] sm:$0xf]
    %v105 = vld [vmem:[%s3 + $0x20] sm:$0xf]
    %v106 = vld [vmem:[%s3 + $0x24] sm:$0xf]
    %v107 = vld [vmem:[%s3 + $0x28] sm:$0xf]
    %v108 = vld [vmem:[%s3 + $0x2c] sm:$0xf]
    %v109 = vld [vmem:[%s3 + $0x30] sm:$0xf]
    %v110 = vld [vmem:[%s3 + $0x34] sm:$0xf]
    %v111 = vld [vmem:[%s3 + $0x38] sm:$0xf]
    %v112 = vld [vmem:[%s3 + $0x3c] sm:$0xf]
    %v113 = vld [vmem:[%s4] sm:$0x1]
    %v115 = vlaneseq
    %v116 = vshrl.u32 %v115, 7
    %v117 = vsub.s32 0, %v116
    %v118 = vrot.slane %v113, %v117
    %v136 = vunpack.c.l.b16 %v97
    %v137 = vunpack.c.l.b16 %v98
    %v138 = vunpack.c.l.b16 %v99
    %v139 = vunpack.c.l.b16 %v100
    %v140 = vunpack.c.l.b16 %v101
    %v141 = vunpack.c.l.b16 %v102
    %v142 = vunpack.c.l.b16 %v103
    %v143 = vunpack.c.l.b16 %v104
    %v144 = vunpack.c.l.b16 %v105
    %v145 = vunpack.c.l.b16 %v106
    %v146 = vunpack.c.l.b16 %v107
    %v147 = vunpack.c.l.b16 %v108
    %v148 = vunpack.c.l.b16 %v109
    %v149 = vunpack.c.l.b16 %v110
    %v150 = vunpack.c.l.b16 %v111
    %v151 = vunpack.c.l.b16 %v112
    %v152 = vpack.c.b16 %v137, %v136
    %v153 = vpack.c.b16 %v139, %v138
    %v154 = vpack.c.b16 %v141, %v140
    %v155 = vpack.c.b16 %v143, %v142
    %v156 = vpack.c.b16 %v145, %v144
    %v157 = vpack.c.b16 %v147, %v146
    %v158 = vpack.c.b16 %v149, %v148
    %v159 = vpack.c.b16 %v151, %v150
    %168 = vmatprep.subr.bf16.mxu0 0
    %169 = vmatpush1.bf16.msra.mxu0 %v152
    %170 = vmatprep.subr.bf16.mxu0 0
    %171 = vmatpush1.bf16.msra.mxu0 %v153
    %172 = vmatprep.subr.bf16.mxu0 0
    %173 = vmatpush1.bf16.msra.mxu0 %v154
    %174 = vmatprep.subr.bf16.mxu0 0
    %175 = vmatpush1.bf16.msra.mxu0 %v155
    %176 = vmatprep.subr.bf16.mxu0 0
    %177 = vmatpush1.bf16.msra.mxu0 %v156
    %178 = vmatprep.subr.bf16.mxu0 0
    %179 = vmatpush1.bf16.msra.mxu0 %v157
    %180 = vmatprep.subr.bf16.mxu0 0
    %181 = vmatpush1.bf16.msra.mxu0 %v158
    %182 = vmatprep.subr.bf16.mxu0 0
    %183 = vmatpush1.bf16.msra.mxu0 %v159
    %184 = vmatprep.subr.bf16.mxu0 0
    %185 = vmatpush1.bf16.msra.mxu0 0
    %186 = vmatprep.subr.bf16.mxu0 0
    %187 = vmatpush1.bf16.msra.mxu0 0
    %188 = vmatprep.subr.bf16.mxu0 0
    %189 = vmatpush1.bf16.msra.mxu0 0
    %190 = vmatprep.subr.bf16.mxu0 0
    %191 = vmatpush1.bf16.msra.mxu0 0
    %192 = vmatprep.subr.bf16.mxu0 0
    %193 = vmatpush1.bf16.msra.mxu0 0
    %194 = vmatprep.subr.bf16.mxu0 0
    %195 = vmatpush1.bf16.msra.mxu0 0
    %196 = vmatprep.subr.bf16.mxu0 0
    %197 = vmatpush1.bf16.msra.mxu0 0
    %198 = vmatprep.subr.bf16.mxu0 0
    %199 = vmatpush1.bf16.msra.mxu0 0
    %200 = vmatprep.mubr.bf16.mxu0 0
    %201 = vmatmul.mubr.bf16.gmra.mrb[0].mxu0 %v96
    %v202 = vpop.f32.mrb[0].mxu0
    %v203 = vadd.f32 %v118, %v202
    %v204 = vpop.f32.mrb[0].mxu0
    %v205 = vpop.f32.mrb[0].mxu0
    %v206 = vpop.f32.mrb[0].mxu0
    %207 = vdwg.mxu0
    %v208 = vmax.f32 %v203, 0.0
    %v209 = vpack.c.bf16 %v208, %v208
    %v210 = vld [vmem:[%s5] sm:$0xf]
    %v211 = vld [vmem:[%s5 + $0x4] sm:$0xf]
    %v212 = vld [vmem:[%s5 + $0x8] sm:$0xf]
    %v213 = vld [vmem:[%s5 + $0xc] sm:$0xf]
    %v214 = vld [vmem:[%s5 + $0x10] sm:$0xf]
    %v215 = vld [vmem:[%s5 + $0x14] sm:$0xf]
    %v216 = vld [vmem:[%s5 + $0x18] sm:$0xf]
    %v217 = vld [vmem:[%s5 + $0x1c] sm:$0xf]
    %v218 = vld [vmem:[%s6] sm:$0x1]
    %v220 = vlaneseq
    %v221 = vshrl.u32 %v220, 7
    %v222 = vsub.s32 0, %v221
    %v223 = vrot.slane %v218, %v222
    %v233 = vunpack.c.l.b16 %v210
    %v234 = vunpack.c.l.b16 %v211
    %v235 = vunpack.c.l.b16 %v212
    %v236 = vunpack.c.l.b16 %v213
    %v237 = vunpack.c.l.b16 %v214
    %v238 = vunpack.c.l.b16 %v215
    %v239 = vunpack.c.l.b16 %v216
    %v240 = vunpack.c.l.b16 %v217
    %v241 = vpack.c.b16 %v234, %v233
    %v242 = vpack.c.b16 %v236, %v235
    %v243 = vpack.c.b16 %v238, %v237
    %v244 = vpack.c.b16 %v240, %v239
    %vm249 = vcmask 523264
    %v251 = vsel %vm249, %v209, 0
    %253 = vmatprep.subr.bf16.mxu0 0
    %254 = vmatpush1.bf16.msra.mxu0 %v241
    %255 = vmatprep.subr.bf16.mxu0 0
    %256 = vmatpush1.bf16.msra.mxu0 %v242
    %257 = vmatprep.subr.bf16.mxu0 0
    %258 = vmatpush1.bf16.msra.mxu0 %v243
    %259 = vmatprep.subr.bf16.mxu0 0
    %260 = vmatpush1.bf16.msra.mxu0 %v244
    %261 = vmatprep.subr.bf16.mxu0 0
    %262 = vmatpush1.bf16.msra.mxu0 0
    %263 = vmatprep.subr.bf16.mxu0 0
    %264 = vmatpush1.bf16.msra.mxu0 0
    %265 = vmatprep.subr.bf16.mxu0 0
    %266 = vmatpush1.bf16.msra.mxu0 0
    %267 = vmatprep.subr.bf16.mxu0 0
    %268 = vmatpush1.bf16.msra.mxu0 0
    %269 = vmatprep.subr.bf16.mxu0 0
    %270 = vmatpush1.bf16.msra.mxu0 0
    %271 = vmatprep.subr.bf16.mxu0 0
    %272 = vmatpush1.bf16.msra.mxu0 0
    %273 = vmatprep.subr.bf16.mxu0 0
    %274 = vmatpush1.bf16.msra.mxu0 0
    %275 = vmatprep.subr.bf16.mxu0 0
    %276 = vmatpush1.bf16.msra.mxu0 0
    %277 = vmatprep.subr.bf16.mxu0 0
    %278 = vmatpush1.bf16.msra.mxu0 0
    %279 = vmatprep.subr.bf16.mxu0 0
    %280 = vmatpush1.bf16.msra.mxu0 0
    %281 = vmatprep.subr.bf16.mxu0 0
    %282 = vmatpush1.bf16.msra.mxu0 0
    %283 = vmatprep.subr.bf16.mxu0 0
    %284 = vmatpush1.bf16.msra.mxu0 0
    %285 = vmatprep.mubr.bf16.mxu0 0
    %286 = vmatmul.mubr.bf16.gmra.mrb[0].mxu0 %v251
    %v287 = vpop.f32.mrb[0].mxu0
    %v288 = vadd.f32 %v223, %v287
    %v289 = vpop.f32.mrb[0].mxu0
    %v290 = vpop.f32.mrb[0].mxu0
    %v291 = vpop.f32.mrb[0].mxu0
    %292 = vdwg.mxu0
    %vm293 = vcmask 64512
    %294 = vst.msk [vmem:[#allocation2] sm:$0xff] %vm293, %v288
    // Predicated region
    $region30: #{tpu_custom_call.1} parent=1 // pred_check
      _
    $region31: #{tpu_custom_call.1} parent=1 // pred_check_branch
      %296 = sbr.rel (0) target = $region33
    $region32: #{tpu_custom_call.1} parent=1 // pred_region
      %s298 = ssub.s32 128, 128
      %299 = vsyncadd [#allocation3], %s298
      %s301 = sshll.u32 [#allocation2], 4
      %s302 = int_to_ptr.vmem [resolvable:$true] %s301
      %304 = dma.vmem_to_hbm [thread:$0]  %s302, 128, %s7, [#allocation3]
    $region33: #{tpu_custom_call.1} parent=1 // pred_fallthru
      _
    // Predicated region
    $region34: #{tpu_custom_call.1} parent=1 // pred_check
      _
    $region35: #{tpu_custom_call.1} parent=1 // pred_check_branch
      %306 = sbr.rel (0) target = $region37
    $region36: #{tpu_custom_call.1} parent=1 // pred_region
      %307 = dma.done [#allocation3], 128
    $region37: #{tpu_custom_call.1} parent=1 // pred_fallthru
      _
    %308 = vsyncpa [#allocation3], 1

</llo_original>
